<compile_context>
chip_gen: v5e
topology: v5e:2x2
jax: 0.10.0
libtpu: 0.0.40
codegen_flags: <defaults>
</compile_context>

<pallas_src>
import functools

import jax
import jax.numpy as jnp
from jax.experimental import pallas as pl
from jax.experimental.pallas import tpu as pltpu


def _round_up(a: int, b: int) -> int:
    return ((a + b - 1) // b) * b


def _cdiv(a: int, b: int) -> int:
    return -(-a // b)


def _gsage_kernel(adj_ref, x_ref, w_ref, b_ref, out_ref, acc_ref, *,
                  d: int, tk: int, x_resident: bool):
    """One (row-tile i, k-tile k) grid step.

    adj_ref: [TM, TK] bf16 (exact 0/1)
    x_ref:   [N_k, D_pad] bf16 (resident) or [TK, D_pad] bf16 (streamed);
             column d is the ones column, columns > d are zero.
    w_ref:   [D_pad, O_pad] f32 (resident, rows >= d zeroed)
    b_ref:   [1, O_pad] f32 (resident)
    out_ref: [TM, O_pad] f32
    acc_ref: [TM, D_pad] f32 scratch (neighbor feature sums + degree column)
    """
    k = pl.program_id(1)

    @pl.when(k == 0)
    def _init():
        acc_ref[...] = jnp.zeros_like(acc_ref)

    if x_resident:
        start = pl.multiple_of(k * tk, tk)
        x_blk = x_ref[pl.ds(start, tk), :]
    else:
        x_blk = x_ref[...]

    # bf16 x bf16 -> f32 single MXU pass; the ones column of x_aug makes
    # acc[:, d] accumulate the exact row degree.
    acc_ref[...] += jnp.dot(adj_ref[...], x_blk,
                            preferred_element_type=jnp.float32)

    @pl.when(k == pl.num_programs(1) - 1)
    def _finalize():
        acc = acc_ref[...]                                # [TM, D_pad] f32
        deg = acc[:, d:d + 1]                             # [TM, 1]
        inv = pl.reciprocal(jnp.maximum(deg, 1.0))        # exact; finalize-only
        # Full-width mean: pad lanes stay 0; the degree lane (-> ~1) is
        # neutralized by the zeroed rows of W^T; deg == 0 rows have acc == 0,
        # so they aggregate to exactly 0 (PyTorch "no neighbors" branch).
        agg = acc * inv
        y = jnp.dot(agg, w_ref[...],
                    preferred_element_type=jnp.float32) + b_ref[...]
        out_ref[...] = y.astype(out_ref.dtype)


def graphsage_layer_v2(x, adj, weight, bias, *, tm=512, tk=4096,
                       x_resident_bytes=8 << 20, adj_buffers=2,
                       vmem_limit_bytes=None):
    """x: [N, D] f32; adj: [N, N] binary (bool/int8/bf16/f32); weight: [O, D]; bias: [O]."""
    n, d = x.shape
    assert adj.shape == (n, n)
    o = weight.shape[0]

    o_pad = _round_up(max(o, 128), 128)   # lane-dense output stores
    d_pad = _round_up(d + 1, 128)         # features + degree column, 128-lane padded

    # ---- tile selection --------------------------------------------------
    tk = min(_round_up(tk, 128), _round_up(n, 128))
    n_k = _round_up(n, tk)

    tm = min(_round_up(tm, 16), _round_up(n, 16))
    n_tiles = _cdiv(n, tm)
    # Megacore (v7x): best-effort even row-tile count (>=2) so the "parallel"
    # row axis splits across both TensorCores; free on single-TC v5e/v6e.
    if n_tiles == 1 and n > 32:
        n_tiles = 2
    elif n_tiles > 1 and n_tiles % 2 == 1:
        n_tiles += 1
    tm = min(tm, _round_up(_cdiv(n, n_tiles), 16))
    n_m = _round_up(n, tm)

    grid = (n_m // tm, n_k // tk)

    # Keep x_aug fully VMEM-resident (one HBM fetch total) when small enough.
    x_resident = n_k * d_pad * 2 <= x_resident_bytes

    # ---- operand packing (gated so pre-conditioned inputs skip the work) --
    # TODO(synk): for very large N, store adj tile-aligned bf16 upstream so this
    #             O(N^2) cast/pad never materializes outside the kernel.
    if adj.dtype != jnp.bfloat16:
        adj = adj.astype(jnp.bfloat16)
    if adj.shape != (n_m, n_k):
        adj = jnp.pad(adj, ((0, n_m - n), (0, n_k - n)))

    # x_aug (bf16): [x | 1 | 0 ... 0]; padded rows stay all-zero.
    x_aug = jnp.zeros((n_k, d_pad), jnp.bfloat16)
    x_aug = x_aug.at[:n, :d].set(x.astype(jnp.bfloat16))
    x_aug = x_aug.at[:n, d].set(1.0)

    # W^T zero-padded to [D_pad, O_pad]; zero rows kill the degree/pad lanes.
    w_t = jnp.zeros((d_pad, o_pad), jnp.float32).at[:d, :o].set(
        weight.astype(jnp.float32).T)
    b_p = jnp.zeros((1, o_pad), jnp.float32).at[0, :o].set(
        bias.astype(jnp.float32))

    # ---- specs -------------------------------------------------------------
    adj_spec_kwargs = {}
    if adj_buffers != 2:     # e.g. pl.Buffered(3) on bandwidth-starved v5e
        adj_spec_kwargs["pipeline_mode"] = pl.Buffered(adj_buffers)
    adj_spec = pl.BlockSpec((tm, tk), lambda i, k: (i, k), **adj_spec_kwargs)

    if x_resident:
        x_spec = pl.BlockSpec((n_k, d_pad), lambda i, k: (0, 0))   # fetched once
    else:
        x_spec = pl.BlockSpec((tk, d_pad), lambda i, k: (k, 0))

    flops = 2 * n_m * n_k * d_pad + 2 * n_m * d_pad * o_pad
    x_bytes = n_k * d_pad * 2
    if not x_resident:
        x_bytes *= (n_m // tm)
    bytes_accessed = (n_m * n_k * 2          # adj (bf16) -- dominant stream
                      + x_bytes              # x_aug (bf16)
                      + d_pad * o_pad * 4    # W^T (once)
                      + o_pad * 4            # bias
                      + n_m * o_pad * 4)     # output

    out = pl.pallas_call(
        functools.partial(_gsage_kernel, d=d, tk=tk, x_resident=x_resident),
        out_shape=jax.ShapeDtypeStruct((n_m, o_pad), jnp.float32),
        grid_spec=pltpu.PrefetchScalarGridSpec(
            num_scalar_prefetch=0,
            grid=grid,
            in_specs=[
                adj_spec,                                          # adj tile (bf16)
                x_spec,                                            # x_aug
                pl.BlockSpec((d_pad, o_pad), lambda i, k: (0, 0)),  # W^T, resident
                pl.BlockSpec((1, o_pad), lambda i, k: (0, 0)),      # bias, resident
            ],
            out_specs=pl.BlockSpec((tm, o_pad), lambda i, k: (i, 0)),
            scratch_shapes=[pltpu.VMEM((tm, d_pad), jnp.float32)],
        ),
        compiler_params=pltpu.CompilerParams(
            dimension_semantics=("parallel", "arbitrary"),
            vmem_limit_bytes=vmem_limit_bytes,
        ),
        cost_estimate=pl.CostEstimate(
            flops=flops, transcendentals=0, bytes_accessed=bytes_accessed),
    )(adj, x_aug, w_t, b_p)
    return out[:n, :o]


def _reference(x, adj, weight, bias):
    adj_f = adj.astype(jnp.float32)
    deg = jnp.sum(adj_f, axis=1, keepdims=True)
    agg = jnp.where(deg > 0, (adj_f @ x) / jnp.maximum(deg, 1.0), 0.0)
    return agg @ weight.T + bias


if __name__ == "__main__":
    key = jax.random.PRNGKey(0)
    N, INPUT_DIM, OUTPUT_DIM = 640, 32, 16

    k_x, k_adj, k_w, k_b = jax.random.split(key, 4)

    x = jax.random.normal(k_x, (N, INPUT_DIM), dtype=jnp.float32)

    # Random binary adjacency shipped already-narrow (bf16, so the wrapper skips
    # the cast); node 0 has no neighbors to exercise the "empty neighbor list ->
    # zeros" branch of the PyTorch module.
    adj = (jax.random.uniform(k_adj, (N, N)) < 0.05).astype(jnp.bfloat16)
    adj = adj.at[0, :].set(0)

    # nn.Linear(input_dim, output_dim) deterministic init: U(-1/sqrt(D), 1/sqrt(D))
    bound = 1.0 / jnp.sqrt(jnp.float32(INPUT_DIM))
    weight = jax.random.uniform(
        k_w, (OUTPUT_DIM, INPUT_DIM), minval=-bound, maxval=bound, dtype=jnp.float32)
    bias = jax.random.uniform(
        k_b, (OUTPUT_DIM,), minval=-bound, maxval=bound, dtype=jnp.float32)

    # Small tiles here so the demo exercises the full (rows x K) accumulation
    # grid, the even-row-tile clamp, and the resident-x slicing path; real
    # workloads keep the tm=512 / tk=4096 defaults.
    y = graphsage_layer_v2(x, adj, weight, bias, tm=128, tk=256)
    y = jax.block_until_ready(y)

    y_ref = _reference(x, adj, weight, bias)
    # Tolerance covers the deliberate bf16 rounding of x before aggregation
    # (adjacency / degree stay exact, accumulation is f32).
    assert jnp.allclose(y, y_ref, atol=1e-2, rtol=1e-2), float(
        jnp.max(jnp.abs(y - y_ref)))

    print("KERNEL_OK")
</pallas_src>

<mosaic_0001>
module attributes {stable_mosaic.version = 11 : i64} {
  func.func @_gsage_kernel(%arg0: i32, %arg1: i32, %arg2: memref<112x256xbf16, #tpu.memory_space<vmem>>, %arg3: memref<768x128xbf16, #tpu.memory_space<vmem>>, %arg4: memref<128x128xf32, #tpu.memory_space<vmem>>, %arg5: memref<1x128xf32, #tpu.memory_space<vmem>>, %arg6: memref<112x128xf32, #tpu.memory_space<vmem>>, %arg7: memref<112x128xf32, #tpu.memory_space<vmem>>) attributes {dimension_semantics = [#tpu.dimension_semantics<parallel>, #tpu.dimension_semantics<arbitrary>], iteration_bounds = array<i64: 6, 3>, scalar_prefetch = 0 : i64, scratch_operands = 1 : i64, tpu.core_type = #tpu.core_type<tc>, window_params = [{transform_indices = @transform_0, window_bounds = array<i64: 112, 256>}, {pipeline_mode = #tpu.pipeline_mode<synchronous>, transform_indices = @transform_1, window_bounds = array<i64: 768, 128>}, {pipeline_mode = #tpu.pipeline_mode<synchronous>, transform_indices = @transform_2, window_bounds = array<i64: 128, 128>}, {pipeline_mode = #tpu.pipeline_mode<synchronous>, transform_indices = @transform_3, window_bounds = array<i64: 1, 128>}, {transform_indices = @transform_4, window_bounds = array<i64: 112, 128>}]} {
    %c0_i32 = arith.constant 0 : i32
    %0 = arith.cmpi eq, %arg1, %c0_i32 : i32
    %1 = arith.extui %0 : i1 to i32
    %c0_i32_0 = arith.constant 0 : i32
    %2 = arith.cmpi ne, %1, %c0_i32_0 : i32
    scf.if %2 {
      %cst_8 = arith.constant 0.000000e+00 : f32
      %15 = vector.broadcast %cst_8 : f32 to vector<112x128xf32>
      %c0_9 = arith.constant 0 : index
      %c0_10 = arith.constant 0 : index
      %16 = vector.load %arg7[%c0_9, %c0_10] : memref<112x128xf32, #tpu.memory_space<vmem>>, vector<112x128xf32>
      tpu.vector_store %arg7[%c0_9, %c0_10], %15 {strides = array<i32>} : memref<112x128xf32, #tpu.memory_space<vmem>>, vector<112x128xf32>,
    } else {
    }
    %c256_i32 = arith.constant 256 : i32
    %3 = arith.muli %arg1, %c256_i32 : i32
    %4 = tpu.assume_multiple %3, 256 : i32
    %5 = arith.index_cast %4 : i32 to index
    %c0 = arith.constant 0 : index
    %6 = vector.load %arg3[%5, %c0] : memref<768x128xbf16, #tpu.memory_space<vmem>>, vector<256x128xbf16>
    %c0_1 = arith.constant 0 : index
    %c0_2 = arith.constant 0 : index
    %7 = vector.load %arg7[%c0_1, %c0_2] : memref<112x128xf32, #tpu.memory_space<vmem>>, vector<112x128xf32>
    %c0_3 = arith.constant 0 : index
    %c0_4 = arith.constant 0 : index
    %8 = vector.load %arg2[%c0_3, %c0_4] : memref<112x256xbf16, #tpu.memory_space<vmem>>, vector<112x256xbf16>
    %cst = arith.constant dense<0.000000e+00> : vector<112x128xf32>
    %9 = tpu.matmul %8, %6, %cst {dimension_numbers = #tpu.dot_dimension_numbers<[1], [0], [0], [1], [0, 0, 1, 1], [], []>} : vector<112x256xbf16>, vector<256x128xbf16>, vector<112x128xf32> -> vector<112x128xf32>
    %10 = arith.addf %7, %9 : vector<112x128xf32>
    %c0_5 = arith.constant 0 : index
    %c0_6 = arith.constant 0 : index
    %11 = vector.load %arg7[%c0_5, %c0_6] : memref<112x128xf32, #tpu.memory_space<vmem>>, vector<112x128xf32>
    tpu.vector_store %arg7[%c0_5, %c0_6], %10 {strides = array<i32>} : memref<112x128xf32, #tpu.memory_space<vmem>>, vector<112x128xf32>,
    %c2_i32 = arith.constant 2 : i32
    %12 = arith.cmpi eq, %arg1, %c2_i32 : i32
    %13 = arith.extui %12 : i1 to i32
    %c0_i32_7 = arith.constant 0 : i32
    %14 = arith.cmpi ne, %13, %c0_i32_7 : i32
    scf.if %14 {
      %c0_8 = arith.constant 0 : index
      %c0_9 = arith.constant 0 : index
      %15 = vector.load %arg7[%c0_8, %c0_9] : memref<112x128xf32, #tpu.memory_space<vmem>>, vector<112x128xf32>
      %16 = vector.extract_strided_slice %15 {offsets = [0, 32], sizes = [112, 1], strides = [1, 1]} : vector<112x128xf32> to vector<112x1xf32>
      %cst_10 = arith.constant 1.000000e+00 : f32
      %17 = vector.broadcast %cst_10 : f32 to vector<112x1xf32>
      %18 = arith.maximumf %16, %17 : vector<112x1xf32>
      %19 = tpu.reciprocal %18 : vector<112x1xf32> -> vector<112x1xf32>
      %20 = vector.broadcast %19 : vector<112x1xf32> to vector<112x128xf32>
      %21 = arith.mulf %15, %20 : vector<112x128xf32>
      %c0_11 = arith.constant 0 : index
      %c0_12 = arith.constant 0 : index
      %22 = vector.load %arg4[%c0_11, %c0_12] : memref<128x128xf32, #tpu.memory_space<vmem>>, vector<128x128xf32>
      %cst_13 = arith.constant dense<0.000000e+00> : vector<112x128xf32>
      %23 = tpu.matmul %21, %22, %cst_13 {dimension_numbers = #tpu.dot_dimension_numbers<[1], [0], [0], [1], [0, 0, 1, 1], [], []>} : vector<112x128xf32>, vector<128x128xf32>, vector<112x128xf32> -> vector<112x128xf32>
      %c0_14 = arith.constant 0 : index
      %c0_15 = arith.constant 0 : index
      %24 = vector.load %arg5[%c0_14, %c0_15] : memref<1x128xf32, #tpu.memory_space<vmem>>, vector<1x128xf32>
      %25 = vector.broadcast %24 : vector<1x128xf32> to vector<112x128xf32>
      %26 = arith.addf %23, %25 : vector<112x128xf32>
      %c0_16 = arith.constant 0 : index
      %c0_17 = arith.constant 0 : index
      %27 = vector.load %arg6[%c0_16, %c0_17] : memref<112x128xf32, #tpu.memory_space<vmem>>, vector<112x128xf32>
      tpu.vector_store %arg6[%c0_16, %c0_17], %26 {strides = array<i32>} : memref<112x128xf32, #tpu.memory_space<vmem>>, vector<112x128xf32>,
    } else {
    }
    return
  }
  func.func @transform_0(%arg0: i32, %arg1: i32) -> (i32, i32) {
    %c0_i32 = arith.constant 0 : i32
    return %arg0, %arg1 : i32, i32
  }
  func.func @transform_1(%arg0: i32, %arg1: i32) -> (i32, i32) {
    %c0_i32 = arith.constant 0 : i32
    %c0_i32_0 = arith.constant 0 : i32
    %c0_i32_1 = arith.constant 0 : i32
    return %c0_i32, %c0_i32_0 : i32, i32
  }
  func.func @transform_2(%arg0: i32, %arg1: i32) -> (i32, i32) {
    %c0_i32 = arith.constant 0 : i32
    %c0_i32_0 = arith.constant 0 : i32
    %c0_i32_1 = arith.constant 0 : i32
    return %c0_i32, %c0_i32_0 : i32, i32
  }
  func.func @transform_3(%arg0: i32, %arg1: i32) -> (i32, i32) {
    %c0_i32 = arith.constant 0 : i32
    %c0_i32_0 = arith.constant 0 : i32
    %c0_i32_1 = arith.constant 0 : i32
    return %c0_i32, %c0_i32_0 : i32, i32
  }
  func.func @transform_4(%arg0: i32, %arg1: i32) -> (i32, i32) {
    %c0_i32 = arith.constant 0 : i32
    %c0_i32_0 = arith.constant 0 : i32
    return %arg0, %c0_i32 : i32, i32
  }
}

</mosaic_0001>

<llo_original>
// kernel: tpu_custom_call.1
$region0: #{tpu_custom_call.1}
  #allocation0 [shape = 'u32[]', space=smem, size = 0x4, offset = 0x4, fixed_abs, tag = 'smem constant byte address 0x4 - core index']
  #allocation1 [shape = 'u32[72,128]{1,0:T(1,128)}', space=vmem, size = 0x9000, scoped, tag = 'internal scratch']
  #allocation2 [shape = 'f32[112,128]{1,0:T(8,128)}', space=vmem, size = 0xe000, scoped, tag = 'scratch operand']
  %s0 = inlined_call_operand.hbm [shape: bf16[672,768], index: 0, kind: input, shape index: {}]
  %s1 = inlined_call_operand.hbm [shape: bf16[768,128], index: 1, kind: input, shape index: {}]
  %s2 = inlined_call_operand.hbm [shape: f32[128,128], index: 2, kind: input, shape index: {}]
  %s3 = inlined_call_operand.vmem [shape: f32[1,128], index: 3, kind: input, shape index: {}]
  %s4 = inlined_call_operand.hbm [shape: f32[672,128], index: 4, kind: output, shape index: {}]
  %s5 = sld [smem:[#allocation0]]
  $region69: #{tpu_custom_call.1} parent=0
    _
  %s7 = ssub.s32 1, %s5
  %s8 = scalar_select 0, %s7, %s5
  $region1: #{tpu_custom_call.1} parent=0
    #allocation3 [shape = 'u8[114688]{0}', space=vmem, size = 0x1c000, scoped, tag = 'input window, operand 0']
    #allocation4 [shape = 's32[2]{0}', space=sflag, size = 0x8, scoped, tag = 'scoped memory for tpu_custom_call.1']
    #allocation5 [shape = 's32[2]{0}', space=sflag, size = 0x8, scoped, tag = 'scoped memory for tpu_custom_call.1']
    #allocation6 [shape = 'u8[196608]{0}', space=vmem, size = 0x30000, scoped, tag = 'input window, operand 1, single buffered']
    #allocation7 [shape = 's32[1]{0}', space=sflag, size = 0x4, scoped, tag = 'scoped memory for tpu_custom_call.1']
    #allocation8 [shape = 'u8[65536]{0}', space=vmem, size = 0x10000, scoped, tag = 'input window, operand 2, single buffered']
    #allocation9 [shape = 'u8[114688]{0}', space=vmem, size = 0x1c000, scoped, tag = 'output window, operand 0']
    %9 = vsyncpa [#allocation4], 0
    %s10 = scalar_lea.sflag [#allocation4], 1
    %11 = vsyncpa %s10, 0
    %12 = vsyncpa [#allocation7], 0
    %13 = vsyncpa [#allocation5], 0
    %s14 = scalar_lea.sflag [#allocation5], 1
    %15 = vsyncpa %s14, 0
    loop: start=0, step=1, limit=20
    $region2: #{tpu_custom_call.1} parent=1 // loop_pre_header
      _
    $region3: #{tpu_custom_call.1} parent=1 // loop_header
      %s17 = sphi 0, %s21
      %p18 = scmp.ge.s32.totalorder %s17, 20
      %s24 = sphi 0, %s36
      %s25 = sphi 0, %s32
      %s26 = sphi 0, %s24
      %s27 = sphi 0, %s25
      %s28 = sphi 0, %s26
      %s29 = sphi 0, %s27
      %s41 = sphi 0, %s43
      %s44 = sphi 0, %s41
      %s45 = sphi 0, %s44
      %s61 = sphi 0, %s45
      %s65 = sphi 0, %s65
      %s67 = sphi 0, %s65
      %s68 = sphi 0, %s67
      %s82 = sphi 0, %s68
      %s86 = sphi 0, %s86
      %s88 = sphi 0, %s86
      %s89 = sphi 0, %s88
      %s103 = sphi 0, %s89
      %s107 = sphi 0, %s107
      %s109 = sphi 0, %s107
      %s110 = sphi 0, %s109
      %s124 = sphi 0, %s110
      %s130 = sphi 0, %s132
      %s133 = sphi 0, %s130
      %s134 = sphi 0, %s133
      %s150 = sphi 0, %s134
    $region4: #{tpu_custom_call.1} parent=1 // loop_header_branch
      %20 = sbr.rel (%p18) target = $region8
    $region5: #{tpu_custom_call.1} parent=1 // loop_body
      %s22 = ssub.s32 %s17, 1
      %s23 = ssub.s32 %s17, 2
      %s30 = sadd.s32 1, %s25
      %p31 = scmp.ge.s32.totalorder %s30, 3
      %s32 = scalar_select %p31, 0, %s30
      %s33 = sadd.s32 1, %s24
      %s34 = scalar_select %p31, %s33, %s24
      %p35 = scmp.ge.s32.totalorder %s34, 6
      %s36 = scalar_select %p35, 0, %s34
      %s37 = ssub.s32 %s24, %s36
      %s38 = ssub.s32 %s25, %s32
      %s39 = sor.u32 %s37, %s38
      %p40 = scmp.eq.s32.totalorder %s39, 0
      %s42 = sadd.s32 %s41, 1
      %s43 = scalar_select %p40, %s41, %s42
      %p46 = pneg %p40
      %p47 = scmp.eq.s32.totalorder %s17, 17
      %p48 = por %p46, %p47
      %p49 = scmp.ne.s32.totalorder %s41, %s44
      %p50 = scmp.eq.s32.totalorder %s17, 0
      %p51 = por %p49, %p50
      %p52 = scmp.ne.s32.totalorder %s41, %s44
      %p53 = scmp.eq.s32.totalorder %s22, 17
      %p54 = por %p52, %p53
      %p55 = scmp.ne.s32.totalorder %s44, %s45
      %p56 = scmp.eq.s32.totalorder %s22, 0
      %p57 = por %p55, %p56
      %p58 = scmp.ne.s32.totalorder %s44, %s45
      %p59 = scmp.eq.s32.totalorder %s23, 17
      %p60 = por %p58, %p59
      %p62 = scmp.ne.s32.totalorder %s45, %s61
      %p63 = scmp.eq.s32.totalorder %s23, 0
      %p64 = por %p62, %p63
      %s66 = sadd.s32 %s65, 1
      %p69 = scmp.eq.s32.totalorder %s17, 17
      %p70 = scmp.ne.s32.totalorder %s65, %s67
      %p71 = scmp.eq.s32.totalorder %s17, 0
      %p72 = por %p70, %p71
      %p73 = scmp.ne.s32.totalorder %s65, %s67
      %p74 = scmp.eq.s32.totalorder %s22, 17
      %p75 = por %p73, %p74
      %p76 = scmp.ne.s32.totalorder %s67, %s68
      %p77 = scmp.eq.s32.totalorder %s22, 0
      %p78 = por %p76, %p77
      %p79 = scmp.ne.s32.totalorder %s67, %s68
      %p80 = scmp.eq.s32.totalorder %s23, 17
      %p81 = por %p79, %p80
      %p83 = scmp.ne.s32.totalorder %s68, %s82
      %p84 = scmp.eq.s32.totalorder %s23, 0
      %p85 = por %p83, %p84
      %s87 = sadd.s32 %s86, 1
      %p90 = scmp.eq.s32.totalorder %s17, 17
      %p91 = scmp.ne.s32.totalorder %s86, %s88
      %p92 = scmp.eq.s32.totalorder %s17, 0
      %p93 = por %p91, %p92
      %p94 = scmp.ne.s32.totalorder %s86, %s88
      %p95 = scmp.eq.s32.totalorder %s22, 17
      %p96 = por %p94, %p95
      %p97 = scmp.ne.s32.totalorder %s88, %s89
      %p98 = scmp.eq.s32.totalorder %s22, 0
      %p99 = por %p97, %p98
      %p100 = scmp.ne.s32.totalorder %s88, %s89
      %p101 = scmp.eq.s32.totalorder %s23, 17
      %p102 = por %p100, %p101
      %p104 = scmp.ne.s32.totalorder %s89, %s103
      %p105 = scmp.eq.s32.totalorder %s23, 0
      %p106 = por %p104, %p105
      %s108 = sadd.s32 %s107, 1
      %p111 = scmp.eq.s32.totalorder %s17, 17
      %p112 = scmp.ne.s32.totalorder %s107, %s109
      %p113 = scmp.eq.s32.totalorder %s17, 0
      %p114 = por %p112, %p113
      %p115 = scmp.ne.s32.totalorder %s107, %s109
      %p116 = scmp.eq.s32.totalorder %s22, 17
      %p117 = por %p115, %p116
      %p118 = scmp.ne.s32.totalorder %s109, %s110
      %p119 = scmp.eq.s32.totalorder %s22, 0
      %p120 = por %p118, %p119
      %p121 = scmp.ne.s32.totalorder %s109, %s110
      %p122 = scmp.eq.s32.totalorder %s23, 17
      %p123 = por %p121, %p122
      %p125 = scmp.ne.s32.totalorder %s110, %s124
      %p126 = scmp.eq.s32.totalorder %s23, 0
      %p127 = por %p125, %p126
      %s128 = ssub.s32 %s24, %s36
      %p129 = scmp.eq.s32.totalorder %s128, 0
      %s131 = sadd.s32 %s130, 1
      %s132 = scalar_select %p129, %s130, %s131
      %p135 = pneg %p129
      %p136 = scmp.eq.s32.totalorder %s17, 17
      %p137 = por %p135, %p136
      %p138 = scmp.ne.s32.totalorder %s130, %s133
      %p139 = scmp.eq.s32.totalorder %s17, 0
      %p140 = por %p138, %p139
      %p141 = scmp.ne.s32.totalorder %s130, %s133
      %p142 = scmp.eq.s32.totalorder %s22, 17
      %p143 = por %p141, %p142
      %p144 = scmp.ne.s32.totalorder %s133, %s134
      %p145 = scmp.eq.s32.totalorder %s22, 0
      %p146 = por %p144, %p145
      %p147 = scmp.ne.s32.totalorder %s133, %s134
      %p148 = scmp.eq.s32.totalorder %s23, 17
      %p149 = por %p147, %p148
      %p151 = scmp.ne.s32.totalorder %s134, %s150
      %p152 = scmp.eq.s32.totalorder %s23, 0
      %p153 = por %p151, %p152
      %p154 = scmp.le.s32.totalorder 1, %s17
      %p155 = scmp.lt.s32.totalorder %s17, 19
      %p156 = pnand %p154, %p155
      %p157 = pneg %p156
      // Predicated region
      $region9: #{tpu_custom_call.1} parent=5 // pred_check
        _
      $region10: #{tpu_custom_call.1} parent=5 // pred_check_branch
        %159 = sbr.rel (%p156) target = $region12
      $region11: #{tpu_custom_call.1} parent=5 // pred_region
        %s160 = ssub.s32 %s17, 1
        // Predicated region
        $region13: #{tpu_custom_call.1} parent=11 // pred_check
          %p161 = pneg %p78
        $region14: #{tpu_custom_call.1} parent=11 // pred_check_branch
          %163 = sbr.rel (%p161) target = $region16
        $region15: #{tpu_custom_call.1} parent=11 // pred_region
          %165 = vsyncadd [#allocation7], 0
          %s166 = sshll.u32 %s1, 4
          %s167 = int_to_ptr.hbm [resolvable:$true] %s166
          %s168 = sshll.u32 [#allocation6], 4
          %s169 = int_to_ptr.vmem [resolvable:$true] %s168
          %174 = dma.hbm_to_vmem [thread:$0]  %s167, 6144, %s169, [#allocation7], 64, 64, 4
        $region16: #{tpu_custom_call.1} parent=11 // pred_fallthru
          _
        // Predicated region
        $region17: #{tpu_custom_call.1} parent=11 // pred_check
          %p175 = pneg %p99
        $region18: #{tpu_custom_call.1} parent=11 // pred_check_branch
          %177 = sbr.rel (%p175) target = $region20
        $region19: #{tpu_custom_call.1} parent=11 // pred_region
          %179 = vsyncadd [#allocation7], 0
          %s180 = sshll.u32 %s2, 4
          %s181 = int_to_ptr.hbm [resolvable:$true] %s180
          %s182 = sshll.u32 [#allocation8], 4
          %s183 = int_to_ptr.vmem [resolvable:$true] %s182
          %188 = dma.hbm_to_vmem [thread:$0]  %s181, 2048, %s183, [#allocation7], 128, 128, 8
        $region20: #{tpu_custom_call.1} parent=11 // pred_fallthru
          _
        // Predicated region
        $region21: #{tpu_custom_call.1} parent=11 // pred_check
          %p189 = pneg %p120
        $region22: #{tpu_custom_call.1} parent=11 // pred_check_branch
          %191 = sbr.rel (%p189) target = $region24
        $region23: #{tpu_custom_call.1} parent=11 // pred_region
          _
        $region24: #{tpu_custom_call.1} parent=11 // pred_fallthru
          _
      $region12: #{tpu_custom_call.1} parent=5 // pred_fallthru
        _
      %p192 = scmp.lt.s32.totalorder %s17, 18
      // Predicated region
      $region25: #{tpu_custom_call.1} parent=5 // pred_check
        %p193 = pneg %p192
      $region26: #{tpu_custom_call.1} parent=5 // pred_check_branch
        %195 = sbr.rel (%p193) target = $region28
      $region27: #{tpu_custom_call.1} parent=5 // pred_region
        // Predicated region
        $region29: #{tpu_custom_call.1} parent=27 // pred_check
          %p196 = pneg %p51
        $region30: #{tpu_custom_call.1} parent=27 // pred_check_branch
          %198 = sbr.rel (%p196) target = $region32
        $region31: #{tpu_custom_call.1} parent=27 // pred_region
          %s199 = sand.u32 %s41, 1
          %s200 = scalar_lea.sflag [#allocation4], %s199
          %s201 = sand.u32 %s41, 1
          %s202 = smul.addr %s201, 112
          %s203 = scalar_lea.vmem [#allocation3], %s202
          %s204 = smul.u32 14, %s24
          %s205 = smul.u32 2, %s25
          %207 = vsyncadd %s200, 0
          %s208 = smul.addr %s204, 6
          %s209 = sadd.s32 %s205, %s208
          %s210 = smul.addr %s209, 4
          %s211 = scalar_lea.hbm %s0, %s210
          %s212 = sshll.u32 %s211, 4
          %s213 = int_to_ptr.hbm [resolvable:$true] %s212
          %s214 = sshll.u32 %s203, 4
          %s215 = int_to_ptr.vmem [resolvable:$true] %s214
          %220 = dma.hbm_to_vmem [thread:$0]  %s213, 1792, %s215, %s200, 384, 128, 8
        $region32: #{tpu_custom_call.1} parent=27 // pred_fallthru
          _
      $region28: #{tpu_custom_call.1} parent=5 // pred_fallthru
        _
      %p221 = scmp.le.s32.totalorder 1, %s17
      %p222 = scmp.lt.s32.totalorder %s17, 19
      %p223 = pnand %p221, %p222
      %p224 = pneg %p223
      // Predicated region
      $region33: #{tpu_custom_call.1} parent=5 // pred_check
        _
      $region34: #{tpu_custom_call.1} parent=5 // pred_check_branch
        %226 = sbr.rel (%p223) target = $region36
      $region35: #{tpu_custom_call.1} parent=5 // pred_region
        %s227 = ssub.s32 %s17, 1
        %s228 = sand.u32 %s44, 1
        %s229 = scalar_lea.sflag [#allocation4], %s228
        %s230 = sand.u32 %s44, 1
        %s231 = smul.addr %s230, 112
        %s232 = scalar_lea.vmem [#allocation3], %s231
        // Predicated region
        $region37: #{tpu_custom_call.1} parent=35 // pred_check
          %p233 = pneg %p57
        $region38: #{tpu_custom_call.1} parent=35 // pred_check_branch
          %235 = sbr.rel (%p233) target = $region40
        $region39: #{tpu_custom_call.1} parent=35 // pred_region
          %237 = dma.done %s229, 1792
        $region40: #{tpu_custom_call.1} parent=35 // pred_fallthru
          _
        // Predicated region
        $region41: #{tpu_custom_call.1} parent=35 // pred_check
          %p238 = pneg %p78
        $region42: #{tpu_custom_call.1} parent=35 // pred_check_branch
          %240 = sbr.rel (%p238) target = $region44
        $region43: #{tpu_custom_call.1} parent=35 // pred_region
          %242 = dma.done [#allocation7], 6144
        $region44: #{tpu_custom_call.1} parent=35 // pred_fallthru
          _
        // Predicated region
        $region45: #{tpu_custom_call.1} parent=35 // pred_check
          %p243 = pneg %p99
        $region46: #{tpu_custom_call.1} parent=35 // pred_check_branch
          %245 = sbr.rel (%p243) target = $region48
        $region47: #{tpu_custom_call.1} parent=35 // pred_region
          %247 = dma.done [#allocation7], 2048
        $region48: #{tpu_custom_call.1} parent=35 // pred_fallthru
          _
        %s248 = sand.u32 %s44, 1
        %s249 = scalar_lea.sflag [#allocation4], %s248
        %s250 = sand.u32 %s44, 1
        %s251 = smul.addr %s250, 112
        %s252 = scalar_lea.vmem [#allocation3], %s251
        %p253 = pneg %p57
        %p254 = pneg %p54
        %p255 = pneg %p78
        %p256 = pneg %p75
        %p257 = pneg %p99
        %p258 = pneg %p96
        %p259 = pneg %p120
        %p260 = pneg %p117
        %p261 = pneg %p146
        %p262 = pneg %p143
        %s263 = sand.u32 %s133, 1
        %s264 = scalar_lea.sflag [#allocation5], %s263
        %s265 = sand.u32 %s133, 1
        %s266 = smul.addr %s265, 112
        %s267 = scalar_lea.vmem [#allocation9], %s266
        %s268 = smul.u32 14, %s26
        %s269 = smul.u32 2, %s27
        %s270 = smul.u32 14, %s26
        %p271 = scmp.eq.s32.totalorder %s27, 0
        // Predicated region
        $region49: #{tpu_custom_call.1} parent=35 // pred_check
          %p272 = pneg %p271
        $region50: #{tpu_custom_call.1} parent=35 // pred_check_branch
          %274 = sbr.rel (%p272) target = $region52
        $region51: #{tpu_custom_call.1} parent=35 // pred_region
          %275 = vst [vmem:[#allocation2] sm:$0xff] 0.0
          %276 = vst [vmem:[#allocation2 + $0x8] sm:$0xff] 0.0
          %277 = vst [vmem:[#allocation2 + $0x10] sm:$0xff] 0.0
          %278 = vst [vmem:[#allocation2 + $0x18] sm:$0xff] 0.0
          %279 = vst [vmem:[#allocation2 + $0x20] sm:$0xff] 0.0
          %280 = vst [vmem:[#allocation2 + $0x28] sm:$0xff] 0.0
          %281 = vst [vmem:[#allocation2 + $0x30] sm:$0xff] 0.0
          %282 = vst [vmem:[#allocation2 + $0x38] sm:$0xff] 0.0
          %283 = vst [vmem:[#allocation2 + $0x40] sm:$0xff] 0.0
          %284 = vst [vmem:[#allocation2 + $0x48] sm:$0xff] 0.0
          %285 = vst [vmem:[#allocation2 + $0x50] sm:$0xff] 0.0
          %286 = vst [vmem:[#allocation2 + $0x58] sm:$0xff] 0.0
          %287 = vst [vmem:[#allocation2 + $0x60] sm:$0xff] 0.0
          %288 = vst [vmem:[#allocation2 + $0x68] sm:$0xff] 0.0
        $region52: #{tpu_custom_call.1} parent=35 // pred_fallthru
          _
        %s289 = smul.u32 %s27, 256
        %s290 = sshra.s32 %s289, 3
        %s291 = sand.u32 %s289, 7
        %s292 = smul.addr %s290, 4
        %s293 = scalar_lea.vmem [#allocation6], %s292
        %v294 = vld [vmem:[%s293] sm:$0xf]
        %v295 = vld [vmem:[%s293 + $0x4] sm:$0xf]
        %v296 = vld [vmem:[%s293 + $0x8] sm:$0xf]
        %v297 = vld [vmem:[%s293 + $0xc] sm:$0xf]
        %v298 = vld [vmem:[%s293 + $0x10] sm:$0xf]
        %v299 = vld [vmem:[%s293 + $0x14] sm:$0xf]
        %v300 = vld [vmem:[%s293 + $0x18] sm:$0xf]
        %v301 = vld [vmem:[%s293 + $0x1c] sm:$0xf]
        %v302 = vld [vmem:[%s293 + $0x20] sm:$0xf]
        %v303 = vld [vmem:[%s293 + $0x24] sm:$0xf]
        %v304 = vld [vmem:[%s293 + $0x28] sm:$0xf]
        %v305 = vld [vmem:[%s293 + $0x2c] sm:$0xf]
        %v306 = vld [vmem:[%s293 + $0x30] sm:$0xf]
        %v307 = vld [vmem:[%s293 + $0x34] sm:$0xf]
        %v308 = vld [vmem:[%s293 + $0x38] sm:$0xf]
        %v309 = vld [vmem:[%s293 + $0x3c] sm:$0xf]
        %v310 = vld [vmem:[%s293 + $0x40] sm:$0xf]
        %v311 = vld [vmem:[%s293 + $0x44] sm:$0xf]
        %v312 = vld [vmem:[%s293 + $0x48] sm:$0xf]
        %v313 = vld [vmem:[%s293 + $0x4c] sm:$0xf]
        %v314 = vld [vmem:[%s293 + $0x50] sm:$0xf]
        %v315 = vld [vmem:[%s293 + $0x54] sm:$0xf]
        %v316 = vld [vmem:[%s293 + $0x58] sm:$0xf]
        %v317 = vld [vmem:[%s293 + $0x5c] sm:$0xf]
        %v318 = vld [vmem:[%s293 + $0x60] sm:$0xf]
        %v319 = vld [vmem:[%s293 + $0x64] sm:$0xf]
        %v320 = vld [vmem:[%s293 + $0x68] sm:$0xf]
        %v321 = vld [vmem:[%s293 + $0x6c] sm:$0xf]
        %v322 = vld [vmem:[%s293 + $0x70] sm:$0xf]
        %v323 = vld [vmem:[%s293 + $0x74] sm:$0xf]
        %v324 = vld [vmem:[%s293 + $0x78] sm:$0xf]
        %v325 = vld [vmem:[%s293 + $0x7c] sm:$0xf]
        %v326 = vld [vmem:[#allocation2] sm:$0xff]
        %v327 = vld [vmem:[#allocation2 + $0x8] sm:$0xff]
        %v328 = vld [vmem:[#allocation2 + $0x10] sm:$0xff]
        %v329 = vld [vmem:[#allocation2 + $0x18] sm:$0xff]
        %v330 = vld [vmem:[#allocation2 + $0x20] sm:$0xff]
        %v331 = vld [vmem:[#allocation2 + $0x28] sm:$0xff]
        %v332 = vld [vmem:[#allocation2 + $0x30] sm:$0xff]
        %v333 = vld [vmem:[#allocation2 + $0x38] sm:$0xff]
        %v334 = vld [vmem:[#allocation2 + $0x40] sm:$0xff]
        %v335 = vld [vmem:[#allocation2 + $0x48] sm:$0xff]
        %v336 = vld [vmem:[#allocation2 + $0x50] sm:$0xff]
        %v337 = vld [vmem:[#allocation2 + $0x58] sm:$0xff]
        %v338 = vld [vmem:[#allocation2 + $0x60] sm:$0xff]
        %v339 = vld [vmem:[#allocation2 + $0x68] sm:$0xff]
        %v340 = vld [vmem:[%s232] sm:$0xff]
        %v341 = vld [vmem:[%s232 + $0x8] sm:$0xff]
        %v342 = vld [vmem:[%s232 + $0x10] sm:$0xff]
        %v343 = vld [vmem:[%s232 + $0x18] sm:$0xff]
        %v344 = vld [vmem:[%s232 + $0x20] sm:$0xff]
        %v345 = vld [vmem:[%s232 + $0x28] sm:$0xff]
        %v346 = vld [vmem:[%s232 + $0x30] sm:$0xff]
        %v347 = vld [vmem:[%s232 + $0x38] sm:$0xff]
        %v348 = vld [vmem:[%s232 + $0x40] sm:$0xff]
        %v349 = vld [vmem:[%s232 + $0x48] sm:$0xff]
        %v350 = vld [vmem:[%s232 + $0x50] sm:$0xff]
        %v351 = vld [vmem:[%s232 + $0x58] sm:$0xff]
        %v352 = vld [vmem:[%s232 + $0x60] sm:$0xff]
        %v353 = vld [vmem:[%s232 + $0x68] sm:$0xff]
        %v368 = vunpack.c.l.b16 %v340
        %v369 = vunpack.c.h.b16 %v340
        %v370 = vunpack.c.l.b16 %v341
        %v371 = vunpack.c.h.b16 %v341
        %v372 = vunpack.c.l.b16 %v342
        %v373 = vunpack.c.h.b16 %v342
        %v374 = vunpack.c.l.b16 %v343
        %v375 = vunpack.c.h.b16 %v343
        %v376 = vunpack.c.l.b16 %v344
        %v377 = vunpack.c.h.b16 %v344
        %v378 = vunpack.c.l.b16 %v345
        %v379 = vunpack.c.h.b16 %v345
        %v380 = vunpack.c.l.b16 %v346
        %v381 = vunpack.c.h.b16 %v346
        %v382 = vunpack.c.l.b16 %v347
        %v383 = vunpack.c.h.b16 %v347
        %v384 = vunpack.c.l.b16 %v348
        %v385 = vunpack.c.h.b16 %v348
        %v386 = vunpack.c.l.b16 %v349
        %v387 = vunpack.c.h.b16 %v349
        %v388 = vunpack.c.l.b16 %v350
        %v389 = vunpack.c.h.b16 %v350
        %v390 = vunpack.c.l.b16 %v351
        %v391 = vunpack.c.h.b16 %v351
        %v392 = vunpack.c.l.b16 %v352
        %v393 = vunpack.c.h.b16 %v352
        %v394 = vunpack.c.l.b16 %v353
        %v395 = vunpack.c.h.b16 %v353
        %v396 = vpack.c.b16 %v370, %v368
        %v397 = vpack.c.b16 %v371, %v369
        %v398 = vpack.c.b16 %v374, %v372
        %v399 = vpack.c.b16 %v375, %v373
        %v400 = vpack.c.b16 %v378, %v376
        %v401 = vpack.c.b16 %v379, %v377
        %v402 = vpack.c.b16 %v382, %v380
        %v403 = vpack.c.b16 %v383, %v381
        %v404 = vpack.c.b16 %v386, %v384
        %v405 = vpack.c.b16 %v387, %v385
        %v406 = vpack.c.b16 %v390, %v388
        %v407 = vpack.c.b16 %v391, %v389
        %v408 = vpack.c.b16 %v394, %v392
        %v409 = vpack.c.b16 %v395, %v393
        %v456 = vunpack.c.l.b16 %v294
        %v457 = vunpack.c.l.b16 %v295
        %v458 = vunpack.c.l.b16 %v296
        %v459 = vunpack.c.l.b16 %v297
        %v460 = vunpack.c.l.b16 %v298
        %v461 = vunpack.c.l.b16 %v299
        %v462 = vunpack.c.l.b16 %v300
        %v463 = vunpack.c.l.b16 %v301
        %v464 = vunpack.c.l.b16 %v302
        %v465 = vunpack.c.l.b16 %v303
        %v466 = vunpack.c.l.b16 %v304
        %v467 = vunpack.c.l.b16 %v305
        %v468 = vunpack.c.l.b16 %v306
        %v469 = vunpack.c.l.b16 %v307
        %v470 = vunpack.c.l.b16 %v308
        %v471 = vunpack.c.l.b16 %v309
        %v472 = vunpack.c.l.b16 %v310
        %v473 = vunpack.c.l.b16 %v311
        %v474 = vunpack.c.l.b16 %v312
        %v475 = vunpack.c.l.b16 %v313
        %v476 = vunpack.c.l.b16 %v314
        %v477 = vunpack.c.l.b16 %v315
        %v478 = vunpack.c.l.b16 %v316
        %v479 = vunpack.c.l.b16 %v317
        %v480 = vunpack.c.l.b16 %v318
        %v481 = vunpack.c.l.b16 %v319
        %v482 = vunpack.c.l.b16 %v320
        %v483 = vunpack.c.l.b16 %v321
        %v484 = vunpack.c.l.b16 %v322
        %v485 = vunpack.c.l.b16 %v323
        %v486 = vunpack.c.l.b16 %v324
        %v487 = vunpack.c.l.b16 %v325
        %v488 = vpack.c.b16 %v457, %v456
        %v489 = vpack.c.b16 %v459, %v458
        %v490 = vpack.c.b16 %v461, %v460
        %v491 = vpack.c.b16 %v463, %v462
        %v492 = vpack.c.b16 %v465, %v464
        %v493 = vpack.c.b16 %v467, %v466
        %v494 = vpack.c.b16 %v469, %v468
        %v495 = vpack.c.b16 %v471, %v470
        %v496 = vpack.c.b16 %v473, %v472
        %v497 = vpack.c.b16 %v475, %v474
        %v498 = vpack.c.b16 %v477, %v476
        %v499 = vpack.c.b16 %v479, %v478
        %v500 = vpack.c.b16 %v481, %v480
        %v501 = vpack.c.b16 %v483, %v482
        %v502 = vpack.c.b16 %v485, %v484
        %v503 = vpack.c.b16 %v487, %v486
        %520 = vmatpush.bf16.msra.mxu0 %v495
        %521 = vmatpush.bf16.msra.mxu0 %v494
        %522 = vmatpush.bf16.msra.mxu0 %v493
        %523 = vmatpush.bf16.msra.mxu0 %v492
        %524 = vmatpush.bf16.msra.mxu0 %v491
        %525 = vmatpush.bf16.msra.mxu0 %v490
        %526 = vmatpush.bf16.msra.mxu0 %v489
        %527 = vmatpush.bf16.msra.mxu0 %v488
        %528 = vmatmul.bf16.gmra.mxu0 %v396
        %v529 = vpop.f32.mrf.mxu0
        %v530 = vadd.f32 0.0, %v529
        %v531 = vpop.f32.mrf.mxu0
        %v532 = vadd.f32 0.0, %v531
        %533 = vmatmul.bf16.gmra.mxu0 %v398
        %v534 = vpop.f32.mrf.mxu0
        %v535 = vadd.f32 0.0, %v534
        %v536 = vpop.f32.mrf.mxu0
        %v537 = vadd.f32 0.0, %v536
        %538 = vmatmul.bf16.gmra.mxu0 %v400
        %v539 = vpop.f32.mrf.mxu0
        %v540 = vadd.f32 0.0, %v539
        %v541 = vpop.f32.mrf.mxu0
        %v542 = vadd.f32 0.0, %v541
        %543 = vmatmul.bf16.gmra.mxu0 %v402
        %v544 = vpop.f32.mrf.mxu0
        %v545 = vadd.f32 0.0, %v544
        %v546 = vpop.f32.mrf.mxu0
        %v547 = vadd.f32 0.0, %v546
        %548 = vmatmul.bf16.gmra.mxu0 %v404
        %v549 = vpop.f32.mrf.mxu0
        %v550 = vadd.f32 0.0, %v549
        %v551 = vpop.f32.mrf.mxu0
        %v552 = vadd.f32 0.0, %v551
        %553 = vmatmul.bf16.gmra.mxu0 %v406
        %v554 = vpop.f32.mrf.mxu0
        %v555 = vadd.f32 0.0, %v554
        %v556 = vpop.f32.mrf.mxu0
        %v557 = vadd.f32 0.0, %v556
        %558 = vmatmul.bf16.gmra.mxu0 %v408
        %v559 = vpop.f32.mrf.mxu0
        %v560 = vadd.f32 0.0, %v559
        %v561 = vpop.f32.mrf.mxu0
        %v562 = vadd.f32 0.0, %v561
        %563 = vdwg.mxu0
        %564 = vmatpush.bf16.msra.mxu0 %v503
        %565 = vmatpush.bf16.msra.mxu0 %v502
        %566 = vmatpush.bf16.msra.mxu0 %v501
        %567 = vmatpush.bf16.msra.mxu0 %v500
        %568 = vmatpush.bf16.msra.mxu0 %v499
        %569 = vmatpush.bf16.msra.mxu0 %v498
        %570 = vmatpush.bf16.msra.mxu0 %v497
        %571 = vmatpush.bf16.msra.mxu0 %v496
        %572 = vmatmul.bf16.gmra.mxu0 %v397
        %v573 = vpop.f32.mrf.mxu0
        %v574 = vadd.f32 %v530, %v573
        %v575 = vpop.f32.mrf.mxu0
        %v576 = vadd.f32 %v532, %v575
        %577 = vmatmul.bf16.gmra.mxu0 %v399
        %v578 = vpop.f32.mrf.mxu0
        %v579 = vadd.f32 %v535, %v578
        %v580 = vpop.f32.mrf.mxu0
        %v581 = vadd.f32 %v537, %v580
        %582 = vmatmul.bf16.gmra.mxu0 %v401
        %v583 = vpop.f32.mrf.mxu0
        %v584 = vadd.f32 %v540, %v583
        %v585 = vpop.f32.mrf.mxu0
        %v586 = vadd.f32 %v542, %v585
        %587 = vmatmul.bf16.gmra.mxu0 %v403
        %v588 = vpop.f32.mrf.mxu0
        %v589 = vadd.f32 %v545, %v588
        %v590 = vpop.f32.mrf.mxu0
        %v591 = vadd.f32 %v547, %v590
        %592 = vmatmul.bf16.gmra.mxu0 %v405
        %v593 = vpop.f32.mrf.mxu0
        %v594 = vadd.f32 %v550, %v593
        %v595 = vpop.f32.mrf.mxu0
        %v596 = vadd.f32 %v552, %v595
        %597 = vmatmul.bf16.gmra.mxu0 %v407
        %v598 = vpop.f32.mrf.mxu0
        %v599 = vadd.f32 %v555, %v598
        %v600 = vpop.f32.mrf.mxu0
        %v601 = vadd.f32 %v557, %v600
        %602 = vmatmul.bf16.gmra.mxu0 %v409
        %v603 = vpop.f32.mrf.mxu0
        %v604 = vadd.f32 %v560, %v603
        %v605 = vpop.f32.mrf.mxu0
        %v606 = vadd.f32 %v562, %v605
        %607 = vdwg.mxu0
        %v608 = vadd.f32 %v326, %v574
        %v609 = vadd.f32 %v327, %v576
        %v610 = vadd.f32 %v328, %v579
        %v611 = vadd.f32 %v329, %v581
        %v612 = vadd.f32 %v330, %v584
        %v613 = vadd.f32 %v331, %v586
        %v614 = vadd.f32 %v332, %v589
        %v615 = vadd.f32 %v333, %v591
        %v616 = vadd.f32 %v334, %v594
        %v617 = vadd.f32 %v335, %v596
        %v618 = vadd.f32 %v336, %v599
        %v619 = vadd.f32 %v337, %v601
        %v620 = vadd.f32 %v338, %v604
        %v621 = vadd.f32 %v339, %v606
        %622 = vst [vmem:[#allocation2] sm:$0xff] %v608
        %623 = vst [vmem:[#allocation2 + $0x8] sm:$0xff] %v609
        %624 = vst [vmem:[#allocation2 + $0x10] sm:$0xff] %v610
        %625 = vst [vmem:[#allocation2 + $0x18] sm:$0xff] %v611
        %626 = vst [vmem:[#allocation2 + $0x20] sm:$0xff] %v612
        %627 = vst [vmem:[#allocation2 + $0x28] sm:$0xff] %v613
        %628 = vst [vmem:[#allocation2 + $0x30] sm:$0xff] %v614
        %629 = vst [vmem:[#allocation2 + $0x38] sm:$0xff] %v615
        %630 = vst [vmem:[#allocation2 + $0x40] sm:$0xff] %v616
        %631 = vst [vmem:[#allocation2 + $0x48] sm:$0xff] %v617
        %632 = vst [vmem:[#allocation2 + $0x50] sm:$0xff] %v618
        %633 = vst [vmem:[#allocation2 + $0x58] sm:$0xff] %v619
        %634 = vst [vmem:[#allocation2 + $0x60] sm:$0xff] %v620
        %635 = vst [vmem:[#allocation2 + $0x68] sm:$0xff] %v621
        %p636 = scmp.eq.s32.totalorder %s27, 2
        // Predicated region
        $region53: #{tpu_custom_call.1} parent=35 // pred_check
          %p637 = pneg %p636
        $region54: #{tpu_custom_call.1} parent=35 // pred_check_branch
          %639 = sbr.rel (%p637) target = $region56
        $region55: #{tpu_custom_call.1} parent=35 // pred_region
          %v640 = vld [vmem:[#allocation2] sm:$0xff]
          %v641 = vld [vmem:[#allocation2 + $0x8] sm:$0xff]
          %v642 = vld [vmem:[#allocation2 + $0x10] sm:$0xff]
          %v643 = vld [vmem:[#allocation2 + $0x18] sm:$0xff]
          %v644 = vld [vmem:[#allocation2 + $0x20] sm:$0xff]
          %v645 = vld [vmem:[#allocation2 + $0x28] sm:$0xff]
          %v646 = vld [vmem:[#allocation2 + $0x30] sm:$0xff]
          %v647 = vld [vmem:[#allocation2 + $0x38] sm:$0xff]
          %v648 = vld [vmem:[#allocation2 + $0x40] sm:$0xff]
          %v649 = vld [vmem:[#allocation2 + $0x48] sm:$0xff]
          %v650 = vld [vmem:[#allocation2 + $0x50] sm:$0xff]
          %v651 = vld [vmem:[#allocation2 + $0x58] sm:$0xff]
          %v652 = vld [vmem:[#allocation2 + $0x60] sm:$0xff]
          %v653 = vld [vmem:[#allocation2 + $0x68] sm:$0xff]
          %v654 = vmax.f32 %v640, 1.0
          %v655 = vmax.f32 %v641, 1.0
          %v656 = vmax.f32 %v642, 1.0
          %v657 = vmax.f32 %v643, 1.0
          %v658 = vmax.f32 %v644, 1.0
          %v659 = vmax.f32 %v645, 1.0
          %v660 = vmax.f32 %v646, 1.0
          %v661 = vmax.f32 %v647, 1.0
          %v662 = vmax.f32 %v648, 1.0
          %v663 = vmax.f32 %v649, 1.0
          %v664 = vmax.f32 %v650, 1.0
          %v665 = vmax.f32 %v651, 1.0
          %v666 = vmax.f32 %v652, 1.0
          %v667 = vmax.f32 %v653, 1.0
          %v668 = vrcp.pop %v654
          %v669 = vmul.f32 %v654, %v668
          %v670 = vsub.f32 1.0, %v669
          %v671 = vmul.f32 %v668, %v670
          %v672 = vadd.f32 %v668, %v671
          %vm673 = vweird.f32 %v654
          %vm674 = vweird.f32 %v668
          %vm675 = vmor %vm673, %vm674
          %v676 = vsel %vm675, %v668, %v672
          %v677 = vand.u32 2147483647, %v654
          %vm678 = vcmp.eq.f32.partialorder %v677, 8.507059e+37
          %v679 = vand.u32 %v654, 2147483648
          %v680 = vor.u32 1.1754944e-38, %v679
          %v681 = vsel %vm678, %v680, %v676
          %v682 = vrcp.pop %v655
          %v683 = vmul.f32 %v655, %v682
          %v684 = vsub.f32 1.0, %v683
          %v685 = vmul.f32 %v682, %v684
          %v686 = vadd.f32 %v682, %v685
          %vm687 = vweird.f32 %v655
          %vm688 = vweird.f32 %v682
          %vm689 = vmor %vm687, %vm688
          %v690 = vsel %vm689, %v682, %v686
          %v691 = vand.u32 2147483647, %v655
          %vm692 = vcmp.eq.f32.partialorder %v691, 8.507059e+37
          %v693 = vand.u32 %v655, 2147483648
          %v694 = vor.u32 1.1754944e-38, %v693
          %v695 = vsel %vm692, %v694, %v690
          %v696 = vrcp.pop %v656
          %v697 = vmul.f32 %v656, %v696
          %v698 = vsub.f32 1.0, %v697
          %v699 = vmul.f32 %v696, %v698
          %v700 = vadd.f32 %v696, %v699
          %vm701 = vweird.f32 %v656
          %vm702 = vweird.f32 %v696
          %vm703 = vmor %vm701, %vm702
          %v704 = vsel %vm703, %v696, %v700
          %v705 = vand.u32 2147483647, %v656
          %vm706 = vcmp.eq.f32.partialorder %v705, 8.507059e+37
          %v707 = vand.u32 %v656, 2147483648
          %v708 = vor.u32 1.1754944e-38, %v707
          %v709 = vsel %vm706, %v708, %v704
          %v710 = vrcp.pop %v657
          %v711 = vmul.f32 %v657, %v710
          %v712 = vsub.f32 1.0, %v711
          %v713 = vmul.f32 %v710, %v712
          %v714 = vadd.f32 %v710, %v713
          %vm715 = vweird.f32 %v657
          %vm716 = vweird.f32 %v710
          %vm717 = vmor %vm715, %vm716
          %v718 = vsel %vm717, %v710, %v714
          %v719 = vand.u32 2147483647, %v657
          %vm720 = vcmp.eq.f32.partialorder %v719, 8.507059e+37
          %v721 = vand.u32 %v657, 2147483648
          %v722 = vor.u32 1.1754944e-38, %v721
          %v723 = vsel %vm720, %v722, %v718
          %v724 = vrcp.pop %v658
          %v725 = vmul.f32 %v658, %v724
          %v726 = vsub.f32 1.0, %v725
          %v727 = vmul.f32 %v724, %v726
          %v728 = vadd.f32 %v724, %v727
          %vm729 = vweird.f32 %v658
          %vm730 = vweird.f32 %v724
          %vm731 = vmor %vm729, %vm730
          %v732 = vsel %vm731, %v724, %v728
          %v733 = vand.u32 2147483647, %v658
          %vm734 = vcmp.eq.f32.partialorder %v733, 8.507059e+37
          %v735 = vand.u32 %v658, 2147483648
          %v736 = vor.u32 1.1754944e-38, %v735
          %v737 = vsel %vm734, %v736, %v732
          %v738 = vrcp.pop %v659
          %v739 = vmul.f32 %v659, %v738
          %v740 = vsub.f32 1.0, %v739
          %v741 = vmul.f32 %v738, %v740
          %v742 = vadd.f32 %v738, %v741
          %vm743 = vweird.f32 %v659
          %vm744 = vweird.f32 %v738
          %vm745 = vmor %vm743, %vm744
          %v746 = vsel %vm745, %v738, %v742
          %v747 = vand.u32 2147483647, %v659
          %vm748 = vcmp.eq.f32.partialorder %v747, 8.507059e+37
          %v749 = vand.u32 %v659, 2147483648
          %v750 = vor.u32 1.1754944e-38, %v749
          %v751 = vsel %vm748, %v750, %v746
          %v752 = vrcp.pop %v660
          %v753 = vmul.f32 %v660, %v752
          %v754 = vsub.f32 1.0, %v753
          %v755 = vmul.f32 %v752, %v754
          %v756 = vadd.f32 %v752, %v755
          %vm757 = vweird.f32 %v660
          %vm758 = vweird.f32 %v752
          %vm759 = vmor %vm757, %vm758
          %v760 = vsel %vm759, %v752, %v756
          %v761 = vand.u32 2147483647, %v660
          %vm762 = vcmp.eq.f32.partialorder %v761, 8.507059e+37
          %v763 = vand.u32 %v660, 2147483648
          %v764 = vor.u32 1.1754944e-38, %v763
          %v765 = vsel %vm762, %v764, %v760
          %v766 = vrcp.pop %v661
          %v767 = vmul.f32 %v661, %v766
          %v768 = vsub.f32 1.0, %v767
          %v769 = vmul.f32 %v766, %v768
          %v770 = vadd.f32 %v766, %v769
          %vm771 = vweird.f32 %v661
          %vm772 = vweird.f32 %v766
          %vm773 = vmor %vm771, %vm772
          %v774 = vsel %vm773, %v766, %v770
          %v775 = vand.u32 2147483647, %v661
          %vm776 = vcmp.eq.f32.partialorder %v775, 8.507059e+37
          %v777 = vand.u32 %v661, 2147483648
          %v778 = vor.u32 1.1754944e-38, %v777
          %v779 = vsel %vm776, %v778, %v774
          %v780 = vrcp.pop %v662
          %v781 = vmul.f32 %v662, %v780
          %v782 = vsub.f32 1.0, %v781
          %v783 = vmul.f32 %v780, %v782
          %v784 = vadd.f32 %v780, %v783
          %vm785 = vweird.f32 %v662
          %vm786 = vweird.f32 %v780
          %vm787 = vmor %vm785, %vm786
          %v788 = vsel %vm787, %v780, %v784
          %v789 = vand.u32 2147483647, %v662
          %vm790 = vcmp.eq.f32.partialorder %v789, 8.507059e+37
          %v791 = vand.u32 %v662, 2147483648
          %v792 = vor.u32 1.1754944e-38, %v791
          %v793 = vsel %vm790, %v792, %v788
          %v794 = vrcp.pop %v663
          %v795 = vmul.f32 %v663, %v794
          %v796 = vsub.f32 1.0, %v795
          %v797 = vmul.f32 %v794, %v796
          %v798 = vadd.f32 %v794, %v797
          %vm799 = vweird.f32 %v663
          %vm800 = vweird.f32 %v794
          %vm801 = vmor %vm799, %vm800
          %v802 = vsel %vm801, %v794, %v798
          %v803 = vand.u32 2147483647, %v663
          %vm804 = vcmp.eq.f32.partialorder %v803, 8.507059e+37
          %v805 = vand.u32 %v663, 2147483648
          %v806 = vor.u32 1.1754944e-38, %v805
          %v807 = vsel %vm804, %v806, %v802
          %v808 = vrcp.pop %v664
          %v809 = vmul.f32 %v664, %v808
          %v810 = vsub.f32 1.0, %v809
          %v811 = vmul.f32 %v808, %v810
          %v812 = vadd.f32 %v808, %v811
          %vm813 = vweird.f32 %v664
          %vm814 = vweird.f32 %v808
          %vm815 = vmor %vm813, %vm814
          %v816 = vsel %vm815, %v808, %v812
          %v817 = vand.u32 2147483647, %v664
          %vm818 = vcmp.eq.f32.partialorder %v817, 8.507059e+37
          %v819 = vand.u32 %v664, 2147483648
          %v820 = vor.u32 1.1754944e-38, %v819
          %v821 = vsel %vm818, %v820, %v816
          %v822 = vrcp.pop %v665
          %v823 = vmul.f32 %v665, %v822
          %v824 = vsub.f32 1.0, %v823
          %v825 = vmul.f32 %v822, %v824
          %v826 = vadd.f32 %v822, %v825
          %vm827 = vweird.f32 %v665
          %vm828 = vweird.f32 %v822
          %vm829 = vmor %vm827, %vm828
          %v830 = vsel %vm829, %v822, %v826
          %v831 = vand.u32 2147483647, %v665
          %vm832 = vcmp.eq.f32.partialorder %v831, 8.507059e+37
          %v833 = vand.u32 %v665, 2147483648
          %v834 = vor.u32 1.1754944e-38, %v833
          %v835 = vsel %vm832, %v834, %v830
          %v836 = vrcp.pop %v666
          %v837 = vmul.f32 %v666, %v836
          %v838 = vsub.f32 1.0, %v837
          %v839 = vmul.f32 %v836, %v838
          %v840 = vadd.f32 %v836, %v839
          %vm841 = vweird.f32 %v666
          %vm842 = vweird.f32 %v836
          %vm843 = vmor %vm841, %vm842
          %v844 = vsel %vm843, %v836, %v840
          %v845 = vand.u32 2147483647, %v666
          %vm846 = vcmp.eq.f32.partialorder %v845, 8.507059e+37
          %v847 = vand.u32 %v666, 2147483648
          %v848 = vor.u32 1.1754944e-38, %v847
          %v849 = vsel %vm846, %v848, %v844
          %v850 = vrcp.pop %v667
          %v851 = vmul.f32 %v667, %v850
          %v852 = vsub.f32 1.0, %v851
          %v853 = vmul.f32 %v850, %v852
          %v854 = vadd.f32 %v850, %v853
          %vm855 = vweird.f32 %v667
          %vm856 = vweird.f32 %v850
          %vm857 = vmor %vm855, %vm856
          %v858 = vsel %vm857, %v850, %v854
          %v859 = vand.u32 2147483647, %v667
          %vm860 = vcmp.eq.f32.partialorder %v859, 8.507059e+37
          %v861 = vand.u32 %v667, 2147483648
          %v862 = vor.u32 1.1754944e-38, %v861
          %v863 = vsel %vm860, %v862, %v858
          %865 = vset.pattern.permute.xlu0 32
          %866 = vperm.xlu0 %865, %v681
          %v867 = vpop.permute.xlu0 %866
          %870 = vset.pattern.permute.xlu0 32
          %871 = vperm.xlu0 %870, %v695
          %v872 = vpop.permute.xlu0 %871
          %875 = vset.pattern.permute.xlu0 32
          %876 = vperm.xlu0 %875, %v709
          %v877 = vpop.permute.xlu0 %876
          %880 = vset.pattern.permute.xlu0 32
          %881 = vperm.xlu0 %880, %v723
          %v882 = vpop.permute.xlu0 %881
          %885 = vset.pattern.permute.xlu0 32
          %886 = vperm.xlu0 %885, %v737
          %v887 = vpop.permute.xlu0 %886
          %890 = vset.pattern.permute.xlu0 32
          %891 = vperm.xlu0 %890, %v751
          %v892 = vpop.permute.xlu0 %891
          %895 = vset.pattern.permute.xlu0 32
          %896 = vperm.xlu0 %895, %v765
          %v897 = vpop.permute.xlu0 %896
          %900 = vset.pattern.permute.xlu0 32
          %901 = vperm.xlu0 %900, %v779
          %v902 = vpop.permute.xlu0 %901
          %905 = vset.pattern.permute.xlu0 32
          %906 = vperm.xlu0 %905, %v793
          %v907 = vpop.permute.xlu0 %906
          %910 = vset.pattern.permute.xlu0 32
          %911 = vperm.xlu0 %910, %v807
          %v912 = vpop.permute.xlu0 %911
          %915 = vset.pattern.permute.xlu0 32
          %916 = vperm.xlu0 %915, %v821
          %v917 = vpop.permute.xlu0 %916
          %920 = vset.pattern.permute.xlu0 32
          %921 = vperm.xlu0 %920, %v835
          %v922 = vpop.permute.xlu0 %921
          %925 = vset.pattern.permute.xlu0 32
          %926 = vperm.xlu0 %925, %v849
          %v927 = vpop.permute.xlu0 %926
          %930 = vset.pattern.permute.xlu0 32
          %931 = vperm.xlu0 %930, %v863
          %v932 = vpop.permute.xlu0 %931
          %v934 = vmul.f32 %v640, %v867
          %v935 = vmul.f32 %v641, %v872
          %v936 = vmul.f32 %v642, %v877
          %v937 = vmul.f32 %v643, %v882
          %v938 = vmul.f32 %v644, %v887
          %v939 = vmul.f32 %v645, %v892
          %v940 = vmul.f32 %v646, %v897
          %v941 = vmul.f32 %v647, %v902
          %v942 = vmul.f32 %v648, %v907
          %v943 = vmul.f32 %v649, %v912
          %v944 = vmul.f32 %v650, %v917
          %v945 = vmul.f32 %v651, %v922
          %v946 = vmul.f32 %v652, %v927
          %v947 = vmul.f32 %v653, %v932
          %v948 = vld [vmem:[#allocation8] sm:$0xff]
          %v949 = vld [vmem:[#allocation8 + $0x8] sm:$0xff]
          %v950 = vld [vmem:[#allocation8 + $0x10] sm:$0xff]
          %v951 = vld [vmem:[#allocation8 + $0x18] sm:$0xff]
          %v952 = vld [vmem:[#allocation8 + $0x20] sm:$0xff]
          %v953 = vld [vmem:[#allocation8 + $0x28] sm:$0xff]
          %v954 = vld [vmem:[#allocation8 + $0x30] sm:$0xff]
          %v955 = vld [vmem:[#allocation8 + $0x38] sm:$0xff]
          %v956 = vld [vmem:[#allocation8 + $0x40] sm:$0xff]
          %v957 = vld [vmem:[#allocation8 + $0x48] sm:$0xff]
          %v958 = vld [vmem:[#allocation8 + $0x50] sm:$0xff]
          %v959 = vld [vmem:[#allocation8 + $0x58] sm:$0xff]
          %v960 = vld [vmem:[#allocation8 + $0x60] sm:$0xff]
          %v961 = vld [vmem:[#allocation8 + $0x68] sm:$0xff]
          %v962 = vld [vmem:[#allocation8 + $0x70] sm:$0xff]
          %v963 = vld [vmem:[#allocation8 + $0x78] sm:$0xff]
          %v964 = vld [vmem:[%s3] sm:$0x1]
          %v966 = vperm.slane %v964, 0
          %968 = vmatpush.msra.mxu0 %v963
          %969 = vmatpush.msra.mxu0 %v962
          %970 = vmatpush.msra.mxu0 %v961
          %971 = vmatpush.msra.mxu0 %v960
          %972 = vmatpush.msra.mxu0 %v959
          %973 = vmatpush.msra.mxu0 %v958
          %974 = vmatpush.msra.mxu0 %v957
          %975 = vmatpush.msra.mxu0 %v956
          %976 = vmatpush.msra.mxu0 %v955
          %977 = vmatpush.msra.mxu0 %v954
          %978 = vmatpush.msra.mxu0 %v953
          %979 = vmatpush.msra.mxu0 %v952
          %980 = vmatpush.msra.mxu0 %v951
          %981 = vmatpush.msra.mxu0 %v950
          %982 = vmatpush.msra.mxu0 %v949
          %983 = vmatpush.msra.mxu0 %v948
          %984 = vmatmul.f32.gmra.mxu0 %v934
          %v985 = vpop.f32.mrf.mxu0
          %v986 = vadd.f32 %v966, %v985
          %987 = vmatmul.f32.gmra.mxu0 %v935
          %v988 = vpop.f32.mrf.mxu0
          %v989 = vadd.f32 %v966, %v988
          %990 = vmatmul.f32.gmra.mxu0 %v936
          %v991 = vpop.f32.mrf.mxu0
          %v992 = vadd.f32 %v966, %v991
          %993 = vmatmul.f32.gmra.mxu0 %v937
          %v994 = vpop.f32.mrf.mxu0
          %v995 = vadd.f32 %v966, %v994
          %996 = vmatmul.f32.gmra.mxu0 %v938
          %v997 = vpop.f32.mrf.mxu0
          %v998 = vadd.f32 %v966, %v997
          %999 = vmatmul.f32.gmra.mxu0 %v939
          %v1000 = vpop.f32.mrf.mxu0
          %v1001 = vadd.f32 %v966, %v1000
          %1002 = vmatmul.f32.gmra.mxu0 %v940
          %v1003 = vpop.f32.mrf.mxu0
          %v1004 = vadd.f32 %v966, %v1003
          %1005 = vmatmul.f32.gmra.mxu0 %v941
          %v1006 = vpop.f32.mrf.mxu0
          %v1007 = vadd.f32 %v966, %v1006
          %1008 = vmatmul.f32.gmra.mxu0 %v942
          %v1009 = vpop.f32.mrf.mxu0
          %v1010 = vadd.f32 %v966, %v1009
          %1011 = vmatmul.f32.gmra.mxu0 %v943
          %v1012 = vpop.f32.mrf.mxu0
          %v1013 = vadd.f32 %v966, %v1012
          %1014 = vmatmul.f32.gmra.mxu0 %v944
          %v1015 = vpop.f32.mrf.mxu0
          %v1016 = vadd.f32 %v966, %v1015
          %1017 = vmatmul.f32.gmra.mxu0 %v945
          %v1018 = vpop.f32.mrf.mxu0
          %v1019 = vadd.f32 %v966, %v1018
          %1020 = vmatmul.f32.gmra.mxu0 %v946
          %v1021 = vpop.f32.mrf.mxu0
          %v1022 = vadd.f32 %v966, %v1021
          %1023 = vmatmul.f32.gmra.mxu0 %v947
          %v1024 = vpop.f32.mrf.mxu0
          %v1025 = vadd.f32 %v966, %v1024
          %1026 = vdwg.mxu0
          %1027 = vst [vmem:[%s267] sm:$0xff] %v986
          %1028 = vst [vmem:[%s267 + $0x8] sm:$0xff] %v989
          %1029 = vst [vmem:[%s267 + $0x10] sm:$0xff] %v992
          %1030 = vst [vmem:[%s267 + $0x18] sm:$0xff] %v995
          %1031 = vst [vmem:[%s267 + $0x20] sm:$0xff] %v998
          %1032 = vst [vmem:[%s267 + $0x28] sm:$0xff] %v1001
          %1033 = vst [vmem:[%s267 + $0x30] sm:$0xff] %v1004
          %1034 = vst [vmem:[%s267 + $0x38] sm:$0xff] %v1007
          %1035 = vst [vmem:[%s267 + $0x40] sm:$0xff] %v1010
          %1036 = vst [vmem:[%s267 + $0x48] sm:$0xff] %v1013
          %1037 = vst [vmem:[%s267 + $0x50] sm:$0xff] %v1016
          %1038 = vst [vmem:[%s267 + $0x58] sm:$0xff] %v1019
          %1039 = vst [vmem:[%s267 + $0x60] sm:$0xff] %v1022
          %1040 = vst [vmem:[%s267 + $0x68] sm:$0xff] %v1025
        $region56: #{tpu_custom_call.1} parent=35 // pred_fallthru
          _
        %s1041 = sand.u32 %s133, 1
        %s1042 = scalar_lea.sflag [#allocation5], %s1041
        %s1043 = sand.u32 %s133, 1
        %s1044 = smul.addr %s1043, 112
        %s1045 = scalar_lea.vmem [#allocation9], %s1044
        // Predicated region
        $region57: #{tpu_custom_call.1} parent=35 // pred_check
          %p1046 = pneg %p143
        $region58: #{tpu_custom_call.1} parent=35 // pred_check_branch
          %1048 = sbr.rel (%p1046) target = $region60
        $region59: #{tpu_custom_call.1} parent=35 // pred_region
          %s1049 = smul.u32 14, %s26
          %1051 = vsyncadd %s1042, 0
          %s1052 = smul.addr %s1049, 8
          %s1053 = scalar_lea.hbm %s4, %s1052
          %s1054 = sshll.u32 %s1045, 4
          %s1055 = int_to_ptr.vmem [resolvable:$true] %s1054
          %s1056 = sshll.u32 %s1053, 4
          %s1057 = int_to_ptr.hbm [resolvable:$true] %s1056
          %1062 = dma.vmem_to_hbm [thread:$0]  %s1055, 1792, %s1057, %s1042, 128, 128, 8
        $region60: #{tpu_custom_call.1} parent=35 // pred_fallthru
          _
      $region36: #{tpu_custom_call.1} parent=5 // pred_fallthru
        _
      %p1063 = scmp.le.s32.totalorder 2, %s17
      // Predicated region
      $region61: #{tpu_custom_call.1} parent=5 // pred_check
        %p1064 = pneg %p1063
      $region62: #{tpu_custom_call.1} parent=5 // pred_check_branch
        %1066 = sbr.rel (%p1064) target = $region64
      $region63: #{tpu_custom_call.1} parent=5 // pred_region
        %s1067 = ssub.s32 %s17, 2
        // Predicated region
        $region65: #{tpu_custom_call.1} parent=63 // pred_check
          %p1068 = pneg %p149
        $region66: #{tpu_custom_call.1} parent=63 // pred_check_branch
          %1070 = sbr.rel (%p1068) target = $region68
        $region67: #{tpu_custom_call.1} parent=63 // pred_region
          %s1071 = sand.u32 %s134, 1
          %s1072 = scalar_lea.sflag [#allocation5], %s1071
          %s1073 = sand.u32 %s134, 1
          %s1074 = smul.addr %s1073, 112
          %s1075 = scalar_lea.vmem [#allocation9], %s1074
          %1077 = dma.done %s1072, 1792
        $region68: #{tpu_custom_call.1} parent=63 // pred_fallthru
          _
      $region64: #{tpu_custom_call.1} parent=5 // pred_fallthru
        _
    $region6: #{tpu_custom_call.1} parent=1 // loop_footer
      %s21 = sadd.s32 1, %s17
    $region7: #{tpu_custom_call.1} parent=1 // loop_footer_branch
      %16 = sbr.rel target = $region3
    $region8: #{tpu_custom_call.1} parent=1 // loop_exit
      _
    %1078 = vsyncpa [#allocation4], 1
    %s1079 = scalar_lea.sflag [#allocation4], 1
    %1080 = vsyncpa %s1079, 1
    %1081 = vsyncpa [#allocation7], 1
    %1082 = vsyncpa [#allocation5], 1
    %s1083 = scalar_lea.sflag [#allocation5], 1
    %1084 = vsyncpa %s1083, 1

</llo_original>
